<compile_context>
chip_gen: v7x
topology: tpu7x:2x2x1
jax: 0.10.0
libtpu: 0.0.40
codegen_flags: <defaults>
</compile_context>

<pallas_src>
import functools

import jax
import jax.numpy as jnp
from jax.experimental import pallas as pl
from jax.experimental.pallas import tpu as pltpu

LN_EPS = 1e-5  # PyTorch nn.LayerNorm default


# ---------------------------------------------------------------------------
# Kernel 1: whole-batch emb projection  -> scale (B, Dp), shift (B, Dp)
# ---------------------------------------------------------------------------
def _emb_kernel(e_ref, ws_ref, wsh_ref, bs_ref, bsh_ref, scale_ref, shift_ref):
    e = e_ref[...].astype(jnp.float32)          # (B, E)
    e = e * jax.nn.sigmoid(e)                   # SiLU
    scale_ref[...] = (jnp.dot(e, ws_ref[...], preferred_element_type=jnp.float32)
                      + bs_ref[...]).astype(scale_ref.dtype)
    shift_ref[...] = (jnp.dot(e, wsh_ref[...], preferred_element_type=jnp.float32)
                      + bsh_ref[...]).astype(shift_ref.dtype)


# ---------------------------------------------------------------------------
# Kernel 2: LayerNorm + FiLM + SiLU + Linear(D, D), tiled over (B, T)
# ---------------------------------------------------------------------------
def _main_kernel(h_ref, scale_ref, shift_ref, gamma_ref, beta_ref, w_ref, b_ref,
                 o_ref, *, inv_d):
    h = h_ref[0].astype(jnp.float32)            # (tT, Dp); padded lanes are exactly 0

    # LayerNorm stats via E[x], E[x^2] over the true D (padded-zero lanes contribute 0
    # to both sums; inv_d = 1/D uses the real feature count).
    s1 = jnp.sum(h, axis=-1, keepdims=True) * inv_d
    s2 = jnp.sum(h * h, axis=-1, keepdims=True) * inv_d
    var = s2 - s1 * s1
    hn = (h - s1) * jax.lax.rsqrt(var + LN_EPS)
    hn = hn * gamma_ref[...] + beta_ref[...]    # padded gamma/beta are 0 -> hn padded = 0

    # FiLM modulation (scale/shift are per-batch rows, padded lanes = 0).
    y = hn * (1.0 + scale_ref[0]) + shift_ref[0]

    # SiLU (kept in f32 on the VPU; only the MXU operands are down-cast).
    y = y * jax.nn.sigmoid(y)
    # TODO(synk): training-mode dropout (stateful RNG masking) not implemented; eval semantics only.

    out = jnp.dot(y.astype(jnp.bfloat16), w_ref[...],
                  preferred_element_type=jnp.float32) + b_ref[...]
    o_ref[0] = out.astype(o_ref.dtype)


def _pad_last(x, d_pad):
    pad = d_pad - x.shape[-1]
    if pad == 0:
        return x
    cfg = [(0, 0)] * (x.ndim - 1) + [(0, pad)]
    return jnp.pad(x, cfg)


@jax.jit
def stylization_block(h, emb, w_scale, w_shift, b_scale, b_shift,
                      gamma, beta, w_out, b_out):
    """h: (B, T, D), emb: (B, E).  Linear weights are stored (in, out);
    w_scale / w_shift are the two torch.chunk halves of the emb Linear."""
    B, T, D = h.shape
    E = emb.shape[-1]
    Dp = max(128, ((D + 127) // 128) * 128)          # lane-dense feature dim
    tT = T if T <= 128 else 128                      # rows per matmul step

    # --- zero-pad the feature axis (keeps the math exact, see kernel comments) ---
    h_p   = _pad_last(h, Dp)
    ws_p  = _pad_last(w_scale, Dp)
    wsh_p = _pad_last(w_shift, Dp)
    bs_p  = _pad_last(b_scale.reshape(1, D), Dp)
    bsh_p = _pad_last(b_shift.reshape(1, D), Dp)
    g_p   = _pad_last(gamma.reshape(1, D), Dp)
    be_p  = _pad_last(beta.reshape(1, D), Dp)
    bo_p  = _pad_last(b_out.reshape(1, D), Dp)
    wo_p  = jnp.pad(w_out, ((0, Dp - D), (0, Dp - D))).astype(jnp.bfloat16)

    # --- emb path: one kernel for the whole batch ---
    scale, shift = pl.pallas_call(
        _emb_kernel,
        out_shape=(jax.ShapeDtypeStruct((B, Dp), jnp.float32),
                   jax.ShapeDtypeStruct((B, Dp), jnp.float32)),
        grid_spec=pltpu.PrefetchScalarGridSpec(
            num_scalar_prefetch=0,
            grid=(1,),
            in_specs=[
                pl.BlockSpec((B, E), lambda i: (0, 0)),
                pl.BlockSpec((E, Dp), lambda i: (0, 0)),
                pl.BlockSpec((E, Dp), lambda i: (0, 0)),
                pl.BlockSpec((1, Dp), lambda i: (0, 0)),
                pl.BlockSpec((1, Dp), lambda i: (0, 0)),
            ],
            out_specs=[pl.BlockSpec((B, Dp), lambda i: (0, 0)),
                       pl.BlockSpec((B, Dp), lambda i: (0, 0))],
        ),
    )(emb, ws_p, wsh_p, bs_p, bsh_p)

    scale3 = scale.reshape(B, 1, Dp)
    shift3 = shift.reshape(B, 1, Dp)

    # --- main path: LN + FiLM + SiLU + Linear, tiled over (B, T) ---
    cost = pl.CostEstimate(
        flops=int(2 * B * T * Dp * Dp + 10 * B * T * Dp),
        transcendentals=int(B * T * Dp),
        bytes_accessed=int(4 * 2 * B * T * Dp + 2 * Dp * Dp + 4 * (2 * B + 3) * Dp),
    )

    out_p = pl.pallas_call(
        functools.partial(_main_kernel, inv_d=1.0 / D),
        out_shape=jax.ShapeDtypeStruct((B, T, Dp), h.dtype),
        grid_spec=pltpu.PrefetchScalarGridSpec(
            num_scalar_prefetch=0,
            grid=(B, pl.cdiv(T, tT)),
            in_specs=[
                pl.BlockSpec((1, tT, Dp), lambda b, t: (b, t, 0)),   # h (padded)
                pl.BlockSpec((1, 1, Dp), lambda b, t: (b, 0, 0)),    # scale
                pl.BlockSpec((1, 1, Dp), lambda b, t: (b, 0, 0)),    # shift
                pl.BlockSpec((1, Dp), lambda b, t: (0, 0)),          # gamma
                pl.BlockSpec((1, Dp), lambda b, t: (0, 0)),          # beta
                pl.BlockSpec((Dp, Dp), lambda b, t: (0, 0)),         # w_out (bf16)
                pl.BlockSpec((1, Dp), lambda b, t: (0, 0)),          # b_out
            ],
            out_specs=pl.BlockSpec((1, tT, Dp), lambda b, t: (b, t, 0)),
        ),
        compiler_params=pltpu.CompilerParams(
            dimension_semantics=("parallel", "parallel")),
        cost_estimate=cost,
    )(h_p, scale3, shift3, g_p, be_p, wo_p, bo_p)

    return out_p[..., :D]


# ---------------------------------------------------------------------------
# Pure-JAX reference (matches the PyTorch module exactly, f32 throughout)
# ---------------------------------------------------------------------------
def reference(h, emb, w_emb, b_emb, gamma, beta, w_out, b_out):
    e = emb * jax.nn.sigmoid(emb)
    emb_out = e @ w_emb + b_emb                       # (B, 2D)
    D = h.shape[-1]
    scale, shift = emb_out[:, :D], emb_out[:, D:]     # torch.chunk order
    mean = h.mean(-1, keepdims=True)
    var = ((h - mean) ** 2).mean(-1, keepdims=True)
    hn = (h - mean) / jnp.sqrt(var + LN_EPS) * gamma + beta
    y = hn * (1.0 + scale[:, None, :]) + shift[:, None, :]
    y = y * jax.nn.sigmoid(y)
    return y @ w_out + b_out


if __name__ == "__main__":
    B, T, D, E = 2, 8, 32, 16     # batch, seq, latent_dim, time_embed_dim

    key = jax.random.PRNGKey(0)
    k = jax.random.split(key, 8)
    h = jax.random.normal(k[0], (B, T, D), jnp.float32)
    emb = jax.random.normal(k[1], (B, E), jnp.float32)

    # Linear(E, 2D) stored (in, out); split into the two torch.chunk halves.
    w_emb = 0.1 * jax.random.normal(k[2], (E, 2 * D), jnp.float32)
    b_emb = 0.1 * jax.random.normal(k[3], (2 * D,), jnp.float32)
    w_scale, w_shift = w_emb[:, :D], w_emb[:, D:]
    b_scale, b_shift = b_emb[:D], b_emb[D:]

    gamma = 1.0 + 0.1 * jax.random.normal(k[4], (D,), jnp.float32)   # LayerNorm weight
    beta = 0.1 * jax.random.normal(k[5], (D,), jnp.float32)          # LayerNorm bias
    # zero_module() would set these to 0 at init; random here to exercise the kernel.
    w_out = 0.1 * jax.random.normal(k[6], (D, D), jnp.float32)       # Linear(D, D), (in, out)
    b_out = 0.1 * jax.random.normal(k[7], (D,), jnp.float32)

    out = stylization_block(h, emb, w_scale, w_shift, b_scale, b_shift,
                            gamma, beta, w_out, b_out)
    out = jax.block_until_ready(out)

    ref = reference(h, emb, w_emb, b_emb, gamma, beta, w_out, b_out)
    assert out.shape == (B, T, D)
    # bf16 MXU operands with f32 accumulation -> tolerance ~1e-2 (per perf review).
    err = float(jnp.max(jnp.abs(out - ref)))
    assert jnp.allclose(out, ref, atol=2e-2, rtol=2e-2), err

    print("KERNEL_OK")
</pallas_src>

<mosaic_0001>
module attributes {stable_mosaic.version = 11 : i64} {
  func.func @_emb_kernel(%arg0: i32, %arg1: memref<2x16xf32, #tpu.memory_space<vmem>>, %arg2: memref<16x128xf32, #tpu.memory_space<vmem>>, %arg3: memref<16x128xf32, #tpu.memory_space<vmem>>, %arg4: memref<1x128xf32, #tpu.memory_space<vmem>>, %arg5: memref<1x128xf32, #tpu.memory_space<vmem>>, %arg6: memref<2x128xf32, #tpu.memory_space<vmem>>, %arg7: memref<2x128xf32, #tpu.memory_space<vmem>>) attributes {dimension_semantics = [#tpu.dimension_semantics<arbitrary>], iteration_bounds = array<i64: 1>, scalar_prefetch = 0 : i64, scratch_operands = 0 : i64, tpu.core_type = #tpu.core_type<tc>, window_params = [{pipeline_mode = #tpu.pipeline_mode<synchronous>, transform_indices = @transform_0, window_bounds = array<i64: 2, 16>}, {pipeline_mode = #tpu.pipeline_mode<synchronous>, transform_indices = @transform_1, window_bounds = array<i64: 16, 128>}, {pipeline_mode = #tpu.pipeline_mode<synchronous>, transform_indices = @transform_2, window_bounds = array<i64: 16, 128>}, {pipeline_mode = #tpu.pipeline_mode<synchronous>, transform_indices = @transform_3, window_bounds = array<i64: 1, 128>}, {pipeline_mode = #tpu.pipeline_mode<synchronous>, transform_indices = @transform_4, window_bounds = array<i64: 1, 128>}, {pipeline_mode = #tpu.pipeline_mode<synchronous>, transform_indices = @transform_5, window_bounds = array<i64: 2, 128>}, {pipeline_mode = #tpu.pipeline_mode<synchronous>, transform_indices = @transform_6, window_bounds = array<i64: 2, 128>}]} {
    %c0 = arith.constant 0 : index
    %c0_0 = arith.constant 0 : index
    %0 = vector.load %arg1[%c0, %c0_0] : memref<2x16xf32, #tpu.memory_space<vmem>>, vector<2x16xf32>
    %1 = arith.negf %0 : vector<2x16xf32>
    %2 = math.exp %1 : vector<2x16xf32>
    %cst = arith.constant 1.000000e+00 : f32
    %3 = vector.broadcast %cst : f32 to vector<2x16xf32>
    %4 = arith.addf %3, %2 : vector<2x16xf32>
    %5 = arith.divf %3, %4 : vector<2x16xf32>
    %6 = arith.mulf %0, %5 : vector<2x16xf32>
    %c0_1 = arith.constant 0 : index
    %c0_2 = arith.constant 0 : index
    %7 = vector.load %arg2[%c0_1, %c0_2] : memref<16x128xf32, #tpu.memory_space<vmem>>, vector<16x128xf32>
    %cst_3 = arith.constant dense<0.000000e+00> : vector<2x128xf32>
    %8 = tpu.matmul %6, %7, %cst_3 {dimension_numbers = #tpu.dot_dimension_numbers<[1], [0], [0], [1], [0, 0, 1, 1], [], []>} : vector<2x16xf32>, vector<16x128xf32>, vector<2x128xf32> -> vector<2x128xf32>
    %c0_4 = arith.constant 0 : index
    %c0_5 = arith.constant 0 : index
    %9 = vector.load %arg4[%c0_4, %c0_5] : memref<1x128xf32, #tpu.memory_space<vmem>>, vector<1x128xf32>
    %10 = vector.broadcast %9 : vector<1x128xf32> to vector<2x128xf32>
    %11 = arith.addf %8, %10 : vector<2x128xf32>
    %c0_6 = arith.constant 0 : index
    %c0_7 = arith.constant 0 : index
    %12 = vector.load %arg6[%c0_6, %c0_7] : memref<2x128xf32, #tpu.memory_space<vmem>>, vector<2x128xf32>
    tpu.vector_store %arg6[%c0_6, %c0_7], %11 {strides = array<i32>} : memref<2x128xf32, #tpu.memory_space<vmem>>, vector<2x128xf32>,
    %c0_8 = arith.constant 0 : index
    %c0_9 = arith.constant 0 : index
    %13 = vector.load %arg3[%c0_8, %c0_9] : memref<16x128xf32, #tpu.memory_space<vmem>>, vector<16x128xf32>
    %cst_10 = arith.constant dense<0.000000e+00> : vector<2x128xf32>
    %14 = tpu.matmul %6, %13, %cst_10 {dimension_numbers = #tpu.dot_dimension_numbers<[1], [0], [0], [1], [0, 0, 1, 1], [], []>} : vector<2x16xf32>, vector<16x128xf32>, vector<2x128xf32> -> vector<2x128xf32>
    %c0_11 = arith.constant 0 : index
    %c0_12 = arith.constant 0 : index
    %15 = vector.load %arg5[%c0_11, %c0_12] : memref<1x128xf32, #tpu.memory_space<vmem>>, vector<1x128xf32>
    %16 = vector.broadcast %15 : vector<1x128xf32> to vector<2x128xf32>
    %17 = arith.addf %14, %16 : vector<2x128xf32>
    %c0_13 = arith.constant 0 : index
    %c0_14 = arith.constant 0 : index
    %18 = vector.load %arg7[%c0_13, %c0_14] : memref<2x128xf32, #tpu.memory_space<vmem>>, vector<2x128xf32>
    tpu.vector_store %arg7[%c0_13, %c0_14], %17 {strides = array<i32>} : memref<2x128xf32, #tpu.memory_space<vmem>>, vector<2x128xf32>,
    return
  }
  func.func @transform_0(%arg0: i32) -> (i32, i32) {
    %c0_i32 = arith.constant 0 : i32
    %c0_i32_0 = arith.constant 0 : i32
    %c0_i32_1 = arith.constant 0 : i32
    return %c0_i32, %c0_i32_0 : i32, i32
  }
  func.func @transform_1(%arg0: i32) -> (i32, i32) {
    %c0_i32 = arith.constant 0 : i32
    %c0_i32_0 = arith.constant 0 : i32
    %c0_i32_1 = arith.constant 0 : i32
    return %c0_i32, %c0_i32_0 : i32, i32
  }
  func.func @transform_2(%arg0: i32) -> (i32, i32) {
    %c0_i32 = arith.constant 0 : i32
    %c0_i32_0 = arith.constant 0 : i32
    %c0_i32_1 = arith.constant 0 : i32
    return %c0_i32, %c0_i32_0 : i32, i32
  }
  func.func @transform_3(%arg0: i32) -> (i32, i32) {
    %c0_i32 = arith.constant 0 : i32
    %c0_i32_0 = arith.constant 0 : i32
    %c0_i32_1 = arith.constant 0 : i32
    return %c0_i32, %c0_i32_0 : i32, i32
  }
  func.func @transform_4(%arg0: i32) -> (i32, i32) {
    %c0_i32 = arith.constant 0 : i32
    %c0_i32_0 = arith.constant 0 : i32
    %c0_i32_1 = arith.constant 0 : i32
    return %c0_i32, %c0_i32_0 : i32, i32
  }
  func.func @transform_5(%arg0: i32) -> (i32, i32) {
    %c0_i32 = arith.constant 0 : i32
    %c0_i32_0 = arith.constant 0 : i32
    %c0_i32_1 = arith.constant 0 : i32
    return %c0_i32, %c0_i32_0 : i32, i32
  }
  func.func @transform_6(%arg0: i32) -> (i32, i32) {
    %c0_i32 = arith.constant 0 : i32
    %c0_i32_0 = arith.constant 0 : i32
    %c0_i32_1 = arith.constant 0 : i32
    return %c0_i32, %c0_i32_0 : i32, i32
  }
}

module attributes {stable_mosaic.version = 11 : i64} {
  func.func @_main_kernel(%arg0: i32, %arg1: i32, %arg2: memref<1x8x128xf32, #tpu.memory_space<vmem>>, %arg3: memref<1x1x128xf32, #tpu.memory_space<vmem>>, %arg4: memref<1x1x128xf32, #tpu.memory_space<vmem>>, %arg5: memref<1x128xf32, #tpu.memory_space<vmem>>, %arg6: memref<1x128xf32, #tpu.memory_space<vmem>>, %arg7: memref<128x128xbf16, #tpu.memory_space<vmem>>, %arg8: memref<1x128xf32, #tpu.memory_space<vmem>>, %arg9: memref<1x8x128xf32, #tpu.memory_space<vmem>>) attributes {dimension_semantics = [#tpu.dimension_semantics<parallel>, #tpu.dimension_semantics<parallel>], iteration_bounds = array<i64: 2, 1>, scalar_prefetch = 0 : i64, scratch_operands = 0 : i64, tpu.core_type = #tpu.core_type<tc>, window_params = [{transform_indices = @transform_0, window_bounds = array<i64: 1, 8, 128>}, {transform_indices = @transform_1, window_bounds = array<i64: 1, 1, 128>}, {transform_indices = @transform_2, window_bounds = array<i64: 1, 1, 128>}, {pipeline_mode = #tpu.pipeline_mode<synchronous>, transform_indices = @transform_3, window_bounds = array<i64: 1, 128>}, {pipeline_mode = #tpu.pipeline_mode<synchronous>, transform_indices = @transform_4, window_bounds = array<i64: 1, 128>}, {pipeline_mode = #tpu.pipeline_mode<synchronous>, transform_indices = @transform_5, window_bounds = array<i64: 128, 128>}, {pipeline_mode = #tpu.pipeline_mode<synchronous>, transform_indices = @transform_6, window_bounds = array<i64: 1, 128>}, {transform_indices = @transform_7, window_bounds = array<i64: 1, 8, 128>}]} {
    %c0 = arith.constant 0 : index
    %c0_0 = arith.constant 0 : index
    %c0_1 = arith.constant 0 : index
    %0 = vector.load %arg2[%c0, %c0_0, %c0_1] : memref<1x8x128xf32, #tpu.memory_space<vmem>>, vector<1x8x128xf32>
    %1 = vector.shape_cast %0 : vector<1x8x128xf32> to vector<8x128xf32>
    %cst = arith.constant dense<0.000000e+00> : vector<8xf32>
    %2 = vector.multi_reduction <add>, %1, %cst [1] : vector<8x128xf32> to vector<8xf32>
    %3 = vector.shape_cast %2 : vector<8xf32> to vector<8x1xf32>
    %cst_2 = arith.constant 3.125000e-02 : f32
    %4 = vector.broadcast %cst_2 : f32 to vector<8x1xf32>
    %5 = arith.mulf %3, %4 : vector<8x1xf32>
    %6 = arith.mulf %1, %1 : vector<8x128xf32>
    %cst_3 = arith.constant dense<0.000000e+00> : vector<8xf32>
    %7 = vector.multi_reduction <add>, %6, %cst_3 [1] : vector<8x128xf32> to vector<8xf32>
    %8 = vector.shape_cast %7 : vector<8xf32> to vector<8x1xf32>
    %cst_4 = arith.constant 3.125000e-02 : f32
    %9 = vector.broadcast %cst_4 : f32 to vector<8x1xf32>
    %10 = arith.mulf %8, %9 : vector<8x1xf32>
    %11 = arith.mulf %5, %5 : vector<8x1xf32>
    %12 = arith.subf %10, %11 : vector<8x1xf32>
    %13 = vector.broadcast %5 : vector<8x1xf32> to vector<8x128xf32>
    %14 = arith.subf %1, %13 : vector<8x128xf32>
    %cst_5 = arith.constant 9.99999974E-6 : f32
    %15 = vector.broadcast %cst_5 : f32 to vector<8x1xf32>
    %16 = arith.addf %12, %15 : vector<8x1xf32>
    %17 = math.rsqrt %16 : vector<8x1xf32>
    %18 = vector.broadcast %17 : vector<8x1xf32> to vector<8x128xf32>
    %19 = arith.mulf %14, %18 : vector<8x128xf32>
    %c0_6 = arith.constant 0 : index
    %c0_7 = arith.constant 0 : index
    %20 = vector.load %arg5[%c0_6, %c0_7] : memref<1x128xf32, #tpu.memory_space<vmem>>, vector<1x128xf32>
    %21 = vector.broadcast %20 : vector<1x128xf32> to vector<8x128xf32>
    %22 = arith.mulf %19, %21 : vector<8x128xf32>
    %c0_8 = arith.constant 0 : index
    %c0_9 = arith.constant 0 : index
    %23 = vector.load %arg6[%c0_8, %c0_9] : memref<1x128xf32, #tpu.memory_space<vmem>>, vector<1x128xf32>
    %24 = vector.broadcast %23 : vector<1x128xf32> to vector<8x128xf32>
    %25 = arith.addf %22, %24 : vector<8x128xf32>
    %c0_10 = arith.constant 0 : index
    %c0_11 = arith.constant 0 : index
    %c0_12 = arith.constant 0 : index
    %26 = vector.load %arg3[%c0_10, %c0_11, %c0_12] : memref<1x1x128xf32, #tpu.memory_space<vmem>>, vector<1x1x128xf32>
    %27 = vector.shape_cast %26 : vector<1x1x128xf32> to vector<1x128xf32>
    %cst_13 = arith.constant 1.000000e+00 : f32
    %28 = vector.broadcast %cst_13 : f32 to vector<1x128xf32>
    %29 = arith.addf %28, %27 : vector<1x128xf32>
    %30 = vector.broadcast %29 : vector<1x128xf32> to vector<8x128xf32>
    %31 = arith.mulf %25, %30 : vector<8x128xf32>
    %c0_14 = arith.constant 0 : index
    %c0_15 = arith.constant 0 : index
    %c0_16 = arith.constant 0 : index
    %32 = vector.load %arg4[%c0_14, %c0_15, %c0_16] : memref<1x1x128xf32, #tpu.memory_space<vmem>>, vector<1x1x128xf32>
    %33 = vector.shape_cast %32 : vector<1x1x128xf32> to vector<1x128xf32>
    %34 = vector.broadcast %33 : vector<1x128xf32> to vector<8x128xf32>
    %35 = arith.addf %31, %34 : vector<8x128xf32>
    %36 = arith.negf %35 : vector<8x128xf32>
    %37 = math.exp %36 : vector<8x128xf32>
    %cst_17 = arith.constant 1.000000e+00 : f32
    %38 = vector.broadcast %cst_17 : f32 to vector<8x128xf32>
    %39 = arith.addf %38, %37 : vector<8x128xf32>
    %40 = arith.divf %38, %39 : vector<8x128xf32>
    %41 = arith.mulf %35, %40 : vector<8x128xf32>
    %42 = arith.truncf %41 : vector<8x128xf32> to vector<8x128xbf16>
    %c0_18 = arith.constant 0 : index
    %c0_19 = arith.constant 0 : index
    %43 = vector.load %arg7[%c0_18, %c0_19] : memref<128x128xbf16, #tpu.memory_space<vmem>>, vector<128x128xbf16>
    %cst_20 = arith.constant dense<0.000000e+00> : vector<8x128xf32>
    %44 = tpu.matmul %42, %43, %cst_20 {dimension_numbers = #tpu.dot_dimension_numbers<[1], [0], [0], [1], [0, 0, 1, 1], [], []>} : vector<8x128xbf16>, vector<128x128xbf16>, vector<8x128xf32> -> vector<8x128xf32>
    %c0_21 = arith.constant 0 : index
    %c0_22 = arith.constant 0 : index
    %45 = vector.load %arg8[%c0_21, %c0_22] : memref<1x128xf32, #tpu.memory_space<vmem>>, vector<1x128xf32>
    %46 = vector.broadcast %45 : vector<1x128xf32> to vector<8x128xf32>
    %47 = arith.addf %44, %46 : vector<8x128xf32>
    %c0_23 = arith.constant 0 : index
    %c0_24 = arith.constant 0 : index
    %c0_25 = arith.constant 0 : index
    %48 = vector.load %arg9[%c0_23, %c0_24, %c0_25] : memref<1x8x128xf32, #tpu.memory_space<vmem>>, vector<1x8x128xf32>
    %49 = vector.shape_cast %48 : vector<1x8x128xf32> to vector<8x128xf32>
    %50 = vector.shape_cast %47 : vector<8x128xf32> to vector<1x8x128xf32>
    tpu.vector_store %arg9[%c0_23, %c0_24, %c0_25], %50 {strides = array<i32>} : memref<1x8x128xf32, #tpu.memory_space<vmem>>, vector<1x8x128xf32>,
    return
  }
  func.func @transform_0(%arg0: i32, %arg1: i32) -> (i32, i32, i32) {
    %c0_i32 = arith.constant 0 : i32
    %c0_i32_0 = arith.constant 0 : i32
    return %arg0, %arg1, %c0_i32 : i32, i32, i32
  }
  func.func @transform_1(%arg0: i32, %arg1: i32) -> (i32, i32, i32) {
    %c0_i32 = arith.constant 0 : i32
    %c0_i32_0 = arith.constant 0 : i32
    %c0_i32_1 = arith.constant 0 : i32
    return %arg0, %c0_i32, %c0_i32_0 : i32, i32, i32
  }
  func.func @transform_2(%arg0: i32, %arg1: i32) -> (i32, i32, i32) {
    %c0_i32 = arith.constant 0 : i32
    %c0_i32_0 = arith.constant 0 : i32
    %c0_i32_1 = arith.constant 0 : i32
    return %arg0, %c0_i32, %c0_i32_0 : i32, i32, i32
  }
  func.func @transform_3(%arg0: i32, %arg1: i32) -> (i32, i32) {
    %c0_i32 = arith.constant 0 : i32
    %c0_i32_0 = arith.constant 0 : i32
    %c0_i32_1 = arith.constant 0 : i32
    return %c0_i32, %c0_i32_0 : i32, i32
  }
  func.func @transform_4(%arg0: i32, %arg1: i32) -> (i32, i32) {
    %c0_i32 = arith.constant 0 : i32
    %c0_i32_0 = arith.constant 0 : i32
    %c0_i32_1 = arith.constant 0 : i32
    return %c0_i32, %c0_i32_0 : i32, i32
  }
  func.func @transform_5(%arg0: i32, %arg1: i32) -> (i32, i32) {
    %c0_i32 = arith.constant 0 : i32
    %c0_i32_0 = arith.constant 0 : i32
    %c0_i32_1 = arith.constant 0 : i32
    return %c0_i32, %c0_i32_0 : i32, i32
  }
  func.func @transform_6(%arg0: i32, %arg1: i32) -> (i32, i32) {
    %c0_i32 = arith.constant 0 : i32
    %c0_i32_0 = arith.constant 0 : i32
    %c0_i32_1 = arith.constant 0 : i32
    return %c0_i32, %c0_i32_0 : i32, i32
  }
  func.func @transform_7(%arg0: i32, %arg1: i32) -> (i32, i32, i32) {
    %c0_i32 = arith.constant 0 : i32
    %c0_i32_0 = arith.constant 0 : i32
    return %arg0, %arg1, %c0_i32 : i32, i32, i32
  }
}

</mosaic_0001>

<llo_original>
// kernel: stylization_block.2
$region0: #{stylization_block.2}
  #allocation0 [shape = 'u32[]', space=smem, size = 0x4, offset = 0x4, fixed_abs, tag = 'smem constant byte address 0x4 - core index']
  #allocation1 [shape = 'u32[144,128]{1,0:T(1,128)}', space=vmem, size = 0x12000, scoped, tag = 'internal scratch']
  %s0 = inlined_call_operand.vmem [shape: f32[2,16], index: 0, kind: input, shape index: {}]
  %s1 = inlined_call_operand.vmem [shape: f32[16,128], index: 1, kind: input, shape index: {}]
  %s2 = inlined_call_operand.vmem [shape: f32[16,128], index: 2, kind: input, shape index: {}]
  %s3 = inlined_call_operand.vmem [shape: f32[1,128], index: 3, kind: input, shape index: {}]
  %s4 = inlined_call_operand.vmem [shape: f32[1,128], index: 4, kind: input, shape index: {}]
  %s5 = inlined_call_operand.vmem [shape: f32[2,128], index: 5, kind: output, shape index: {0}]
  %s6 = inlined_call_operand.vmem [shape: f32[2,128], index: 6, kind: output, shape index: {1}]
  %7 = xla_tuple %s5, %s6
  %s8 = sld [smem:[#allocation0]]
  $region38: #{stylization_block.2} parent=0
    _
  %s10 = ssub.s32 1, %s8
  %s11 = scalar_select 0, %s10, %s8
  // Predicated region
  $region2: #{stylization_block.2} parent=0 // pred_check
    _
  $region3: #{stylization_block.2} parent=0 // pred_check_branch
    %13 = sbr.rel (0) target = $region5
  $region4: #{stylization_block.2} parent=0 // pred_region
    _
  $region5: #{stylization_block.2} parent=0 // pred_fallthru
    _
  // Predicated region
  $region6: #{stylization_block.2} parent=0 // pred_check
    _
  $region7: #{stylization_block.2} parent=0 // pred_check_branch
    %15 = sbr.rel (0) target = $region9
  $region8: #{stylization_block.2} parent=0 // pred_region
    _
  $region9: #{stylization_block.2} parent=0 // pred_fallthru
    _
  // Predicated region
  $region10: #{stylization_block.2} parent=0 // pred_check
    _
  $region11: #{stylization_block.2} parent=0 // pred_check_branch
    %17 = sbr.rel (0) target = $region13
  $region12: #{stylization_block.2} parent=0 // pred_region
    _
  $region13: #{stylization_block.2} parent=0 // pred_fallthru
    _
  // Predicated region
  $region14: #{stylization_block.2} parent=0 // pred_check
    _
  $region15: #{stylization_block.2} parent=0 // pred_check_branch
    %19 = sbr.rel (0) target = $region17
  $region16: #{stylization_block.2} parent=0 // pred_region
    _
  $region17: #{stylization_block.2} parent=0 // pred_fallthru
    _
  // Predicated region
  $region18: #{stylization_block.2} parent=0 // pred_check
    _
  $region19: #{stylization_block.2} parent=0 // pred_check_branch
    %21 = sbr.rel (0) target = $region21
  $region20: #{stylization_block.2} parent=0 // pred_region
    _
  $region21: #{stylization_block.2} parent=0 // pred_fallthru
    _
  %v22 = vld [vmem:[%s0] sm:$0x3]
  %v23 = vxor.u32 %v22, 2147483648
  %v24 = vmul.f32 %v23, 1.442695
  %v25 = vpow.pop %v24
  %v26 = vadd.f32 %v25, 1.0
  %v27 = vrcp.pop %v26
  %v28 = vmul.f32 1.0, %v27
  %v29 = vmul.f32 %v22, %v28
  %v30 = vld [vmem:[%s1] sm:$0xff]
  %v31 = vld [vmem:[%s1 + $0x8] sm:$0xff]
  %v32 = vld [vmem:[%s3] sm:$0x1]
  %v34 = vlaneseq
  %v35 = vshrl.u32 %v34, 7
  %v36 = vsub.s32 0, %v35
  %v37 = vrot.slane %v32, %v36
  %vm39 = vcmask 130048
  %v41 = vsel %vm39, %v29, 0
  %43 = vmatprep.subr.mxu0 0.0
  %44 = vmatpush1.msra.mxu0 %v30
  %45 = vmatprep.subr.mxu0 0.0
  %46 = vmatpush1.msra.mxu0 %v31
  %47 = vmatprep.subr.mxu0 0.0
  %48 = vmatpush1.msra.mxu0 0.0
  %49 = vmatprep.subr.mxu0 0.0
  %50 = vmatpush1.msra.mxu0 0.0
  %51 = vmatprep.subr.mxu0 0.0
  %52 = vmatpush1.msra.mxu0 0.0
  %53 = vmatprep.subr.mxu0 0.0
  %54 = vmatpush1.msra.mxu0 0.0
  %55 = vmatprep.subr.mxu0 0.0
  %56 = vmatpush1.msra.mxu0 0.0
  %57 = vmatprep.subr.mxu0 0.0
  %58 = vmatpush1.msra.mxu0 0.0
  %59 = vmatprep.subr.mxu0 0.0
  %60 = vmatpush1.msra.mxu0 0.0
  %61 = vmatprep.subr.mxu0 0.0
  %62 = vmatpush1.msra.mxu0 0.0
  %63 = vmatprep.subr.mxu0 0.0
  %64 = vmatpush1.msra.mxu0 0.0
  %65 = vmatprep.subr.mxu0 0.0
  %66 = vmatpush1.msra.mxu0 0.0
  %67 = vmatprep.subr.mxu0 0.0
  %68 = vmatpush1.msra.mxu0 0.0
  %69 = vmatprep.subr.mxu0 0.0
  %70 = vmatpush1.msra.mxu0 0.0
  %71 = vmatprep.subr.mxu0 0.0
  %72 = vmatpush1.msra.mxu0 0.0
  %73 = vmatprep.subr.mxu0 0.0
  %74 = vmatpush1.msra.mxu0 0.0
  %75 = vmatprep.subr.mxu0 0.0
  %76 = vmatpush1.msra.mxu0 0.0
  %77 = vmatprep.subr.mxu0 0.0
  %78 = vmatpush1.msra.mxu0 0.0
  %79 = vmatprep.subr.mxu0 0.0
  %80 = vmatpush1.msra.mxu0 0.0
  %81 = vmatprep.subr.mxu0 0.0
  %82 = vmatpush1.msra.mxu0 0.0
  %83 = vmatprep.subr.mxu0 0.0
  %84 = vmatpush1.msra.mxu0 0.0
  %85 = vmatprep.subr.mxu0 0.0
  %86 = vmatpush1.msra.mxu0 0.0
  %87 = vmatprep.subr.mxu0 0.0
  %88 = vmatpush1.msra.mxu0 0.0
  %89 = vmatprep.subr.mxu0 0.0
  %90 = vmatpush1.msra.mxu0 0.0
  %91 = vmatprep.subr.mxu0 0.0
  %92 = vmatpush1.msra.mxu0 0.0
  %93 = vmatprep.subr.mxu0 0.0
  %94 = vmatpush1.msra.mxu0 0.0
  %95 = vmatprep.subr.mxu0 0.0
  %96 = vmatpush1.msra.mxu0 0.0
  %97 = vmatprep.subr.mxu0 0.0
  %98 = vmatpush1.msra.mxu0 0.0
  %99 = vmatprep.subr.mxu0 0.0
  %100 = vmatpush1.msra.mxu0 0.0
  %101 = vmatprep.subr.mxu0 0.0
  %102 = vmatpush1.msra.mxu0 0.0
  %103 = vmatprep.subr.mxu0 0.0
  %104 = vmatpush1.msra.mxu0 0.0
  %105 = vmatprep.subr.mxu0 0.0
  %106 = vmatpush1.msra.mxu0 0.0
  %107 = vmatprep.mubr.f32.mxu0 0.0
  %108 = vmatmul.mubr.f32.gmra.mrb[0].mxu0 %v41
  %v109 = vpop.f32.mrb[0].mxu0
  %v110 = vadd.f32 %v37, %v109
  %v111 = vpop.f32.mrb[0].mxu0
  %112 = vdwg.mxu0
  %113 = vst [vmem:[%s5] sm:$0x3] %v110
  %v114 = vld [vmem:[%s2] sm:$0xff]
  %v115 = vld [vmem:[%s2 + $0x8] sm:$0xff]
  %v116 = vld [vmem:[%s4] sm:$0x1]
  %v118 = vlaneseq
  %v119 = vshrl.u32 %v118, 7
  %v120 = vsub.s32 0, %v119
  %v121 = vrot.slane %v116, %v120
  %123 = vmatprep.subr.mxu0 0.0
  %124 = vmatpush1.msra.mxu0 %v114
  %125 = vmatprep.subr.mxu0 0.0
  %126 = vmatpush1.msra.mxu0 %v115
  %127 = vmatprep.subr.mxu0 0.0
  %128 = vmatpush1.msra.mxu0 0.0
  %129 = vmatprep.subr.mxu0 0.0
  %130 = vmatpush1.msra.mxu0 0.0
  %131 = vmatprep.subr.mxu0 0.0
  %132 = vmatpush1.msra.mxu0 0.0
  %133 = vmatprep.subr.mxu0 0.0
  %134 = vmatpush1.msra.mxu0 0.0
  %135 = vmatprep.subr.mxu0 0.0
  %136 = vmatpush1.msra.mxu0 0.0
  %137 = vmatprep.subr.mxu0 0.0
  %138 = vmatpush1.msra.mxu0 0.0
  %139 = vmatprep.subr.mxu0 0.0
  %140 = vmatpush1.msra.mxu0 0.0
  %141 = vmatprep.subr.mxu0 0.0
  %142 = vmatpush1.msra.mxu0 0.0
  %143 = vmatprep.subr.mxu0 0.0
  %144 = vmatpush1.msra.mxu0 0.0
  %145 = vmatprep.subr.mxu0 0.0
  %146 = vmatpush1.msra.mxu0 0.0
  %147 = vmatprep.subr.mxu0 0.0
  %148 = vmatpush1.msra.mxu0 0.0
  %149 = vmatprep.subr.mxu0 0.0
  %150 = vmatpush1.msra.mxu0 0.0
  %151 = vmatprep.subr.mxu0 0.0
  %152 = vmatpush1.msra.mxu0 0.0
  %153 = vmatprep.subr.mxu0 0.0
  %154 = vmatpush1.msra.mxu0 0.0
  %155 = vmatprep.subr.mxu0 0.0
  %156 = vmatpush1.msra.mxu0 0.0
  %157 = vmatprep.subr.mxu0 0.0
  %158 = vmatpush1.msra.mxu0 0.0
  %159 = vmatprep.subr.mxu0 0.0
  %160 = vmatpush1.msra.mxu0 0.0
  %161 = vmatprep.subr.mxu0 0.0
  %162 = vmatpush1.msra.mxu0 0.0
  %163 = vmatprep.subr.mxu0 0.0
  %164 = vmatpush1.msra.mxu0 0.0
  %165 = vmatprep.subr.mxu0 0.0
  %166 = vmatpush1.msra.mxu0 0.0
  %167 = vmatprep.subr.mxu0 0.0
  %168 = vmatpush1.msra.mxu0 0.0
  %169 = vmatprep.subr.mxu0 0.0
  %170 = vmatpush1.msra.mxu0 0.0
  %171 = vmatprep.subr.mxu0 0.0
  %172 = vmatpush1.msra.mxu0 0.0
  %173 = vmatprep.subr.mxu0 0.0
  %174 = vmatpush1.msra.mxu0 0.0
  %175 = vmatprep.subr.mxu0 0.0
  %176 = vmatpush1.msra.mxu0 0.0
  %177 = vmatprep.subr.mxu0 0.0
  %178 = vmatpush1.msra.mxu0 0.0
  %179 = vmatprep.subr.mxu0 0.0
  %180 = vmatpush1.msra.mxu0 0.0
  %181 = vmatprep.subr.mxu0 0.0
  %182 = vmatpush1.msra.mxu0 0.0
  %183 = vmatprep.subr.mxu0 0.0
  %184 = vmatpush1.msra.mxu0 0.0
  %185 = vmatprep.subr.mxu0 0.0
  %186 = vmatpush1.msra.mxu0 0.0
  %187 = vmatprep.mubr.f32.mxu0 0.0
  %188 = vmatmul.mubr.f32.gmra.mrb[0].mxu0 %v41
  %v189 = vpop.f32.mrb[0].mxu0
  %v190 = vadd.f32 %v121, %v189
  %v191 = vpop.f32.mrb[0].mxu0
  %192 = vdwg.mxu0
  %193 = vst [vmem:[%s6] sm:$0x3] %v190
  // Predicated region
  $region22: #{stylization_block.2} parent=0 // pred_check
    _
  $region23: #{stylization_block.2} parent=0 // pred_check_branch
    %195 = sbr.rel (0) target = $region25
  $region24: #{stylization_block.2} parent=0 // pred_region
    _
  $region25: #{stylization_block.2} parent=0 // pred_fallthru
    _
  // Predicated region
  $region26: #{stylization_block.2} parent=0 // pred_check
    _
  $region27: #{stylization_block.2} parent=0 // pred_check_branch
    %197 = sbr.rel (0) target = $region29
  $region28: #{stylization_block.2} parent=0 // pred_region
    _
  $region29: #{stylization_block.2} parent=0 // pred_fallthru
    _
  // Predicated region
  $region30: #{stylization_block.2} parent=0 // pred_check
    _
  $region31: #{stylization_block.2} parent=0 // pred_check_branch
    %199 = sbr.rel (0) target = $region33
  $region32: #{stylization_block.2} parent=0 // pred_region
    _
  $region33: #{stylization_block.2} parent=0 // pred_fallthru
    _
  // Predicated region
  $region34: #{stylization_block.2} parent=0 // pred_check
    _
  $region35: #{stylization_block.2} parent=0 // pred_check_branch
    %201 = sbr.rel (0) target = $region37
  $region36: #{stylization_block.2} parent=0 // pred_region
    _
  $region37: #{stylization_block.2} parent=0 // pred_fallthru
    _

// kernel: stylization_block.3
$region0: #{stylization_block.3}
  #allocation0 [shape = 'u32[]', space=smem, size = 0x4, offset = 0x4, fixed_abs, tag = 'smem constant byte address 0x4 - core index']
  #allocation1 [shape = 'u32[144,128]{1,0:T(1,128)}', space=vmem, size = 0x12000, scoped, tag = 'internal scratch']
  %s0 = inlined_call_operand.vmem [shape: f32[2,8,128], index: 0, kind: input, shape index: {}]
  %s1 = inlined_call_operand.vmem [shape: f32[2,1,128], index: 1, kind: input, shape index: {}]
  %s2 = inlined_call_operand.vmem [shape: f32[2,1,128], index: 2, kind: input, shape index: {}]
  %s3 = inlined_call_operand.vmem [shape: f32[1,128], index: 3, kind: input, shape index: {}]
  %s4 = inlined_call_operand.vmem [shape: f32[1,128], index: 4, kind: input, shape index: {}]
  %s5 = inlined_call_operand.vmem [shape: bf16[128,128], index: 5, kind: input, shape index: {}]
  %s6 = inlined_call_operand.vmem [shape: f32[1,128], index: 6, kind: input, shape index: {}]
  %s7 = inlined_call_operand.hbm [shape: f32[2,8,128], index: 7, kind: output, shape index: {}]
  %s8 = sld [smem:[#allocation0]]
  $region61: #{stylization_block.3} parent=0
    _
  %s10 = ssub.s32 1, %s8
  %s11 = scalar_select 0, %s10, %s8
  $region1: #{stylization_block.3} parent=0
    #allocation2 [shape = 'u8[8192]{0}', space=vmem, size = 0x2000, scoped, tag = 'output window, operand 0']
    #allocation3 [shape = 's32[2]{0}', space=sflag, size = 0x8, scoped, tag = 'scoped memory for stylization_block.3']
    %12 = vsyncpa [#allocation3], 0
    %s13 = scalar_lea.sflag [#allocation3], 1
    %14 = vsyncpa %s13, 0
    loop: start=0, step=1, limit=4
    $region2: #{stylization_block.3} parent=1 // loop_pre_header
      _
    $region3: #{stylization_block.3} parent=1 // loop_header
      %s16 = sphi 0, %s20
      %p17 = scmp.ge.s32.totalorder %s16, 4
      %s23 = sphi 0, %s35
      %s24 = sphi 0, %s31
      %s25 = sphi 0, %s23
      %s26 = sphi 0, %s24
      %s27 = sphi 0, %s25
      %s28 = sphi 0, %s26
      %s40 = sphi 0, %s42
      %s43 = sphi 0, %s40
      %s44 = sphi 0, %s43
      %s60 = sphi 0, %s44
      %s66 = sphi 0, %s68
      %s69 = sphi 0, %s66
      %s70 = sphi 0, %s69
      %s86 = sphi 0, %s70
      %s92 = sphi 0, %s94
      %s95 = sphi 0, %s92
      %s96 = sphi 0, %s95
      %s112 = sphi 0, %s96
      %s116 = sphi 0, %s116
      %s118 = sphi 0, %s116
      %s119 = sphi 0, %s118
      %s133 = sphi 0, %s119
      %s137 = sphi 0, %s137
      %s139 = sphi 0, %s137
      %s140 = sphi 0, %s139
      %s154 = sphi 0, %s140
      %s158 = sphi 0, %s158
      %s160 = sphi 0, %s158
      %s161 = sphi 0, %s160
      %s175 = sphi 0, %s161
      %s179 = sphi 0, %s179
      %s181 = sphi 0, %s179
      %s182 = sphi 0, %s181
      %s196 = sphi 0, %s182
      %s204 = sphi 0, %s206
      %s207 = sphi 0, %s204
      %s208 = sphi 0, %s207
      %s224 = sphi 0, %s208
    $region4: #{stylization_block.3} parent=1 // loop_header_branch
      %19 = sbr.rel (%p17) target = $region8
    $region5: #{stylization_block.3} parent=1 // loop_body
      %s21 = ssub.s32 %s16, 1
      %s22 = ssub.s32 %s16, 2
      %s29 = sadd.s32 1, %s24
      %p30 = scmp.ge.s32.totalorder %s29, 1
      %s31 = scalar_select %p30, 0, %s29
      %s32 = sadd.s32 1, %s23
      %s33 = scalar_select %p30, %s32, %s23
      %p34 = scmp.ge.s32.totalorder %s33, 2
      %s35 = scalar_select %p34, 0, %s33
      %s36 = ssub.s32 %s23, %s35
      %s37 = ssub.s32 %s24, %s31
      %s38 = sor.u32 %s36, %s37
      %p39 = scmp.eq.s32.totalorder %s38, 0
      %s41 = sadd.s32 %s40, 1
      %s42 = scalar_select %p39, %s40, %s41
      %p45 = pneg %p39
      %p46 = scmp.eq.s32.totalorder %s16, 1
      %p47 = por %p45, %p46
      %p48 = scmp.ne.s32.totalorder %s40, %s43
      %p49 = scmp.eq.s32.totalorder %s16, 0
      %p50 = por %p48, %p49
      %p51 = scmp.ne.s32.totalorder %s40, %s43
      %p52 = scmp.eq.s32.totalorder %s21, 1
      %p53 = por %p51, %p52
      %p54 = scmp.ne.s32.totalorder %s43, %s44
      %p55 = scmp.eq.s32.totalorder %s21, 0
      %p56 = por %p54, %p55
      %p57 = scmp.ne.s32.totalorder %s43, %s44
      %p58 = scmp.eq.s32.totalorder %s22, 1
      %p59 = por %p57, %p58
      %p61 = scmp.ne.s32.totalorder %s44, %s60
      %p62 = scmp.eq.s32.totalorder %s22, 0
      %p63 = por %p61, %p62
      %s64 = ssub.s32 %s23, %s35
      %p65 = scmp.eq.s32.totalorder %s64, 0
      %s67 = sadd.s32 %s66, 1
      %s68 = scalar_select %p65, %s66, %s67
      %p71 = pneg %p65
      %p72 = scmp.eq.s32.totalorder %s16, 1
      %p73 = por %p71, %p72
      %p74 = scmp.ne.s32.totalorder %s66, %s69
      %p75 = scmp.eq.s32.totalorder %s16, 0
      %p76 = por %p74, %p75
      %p77 = scmp.ne.s32.totalorder %s66, %s69
      %p78 = scmp.eq.s32.totalorder %s21, 1
      %p79 = por %p77, %p78
      %p80 = scmp.ne.s32.totalorder %s69, %s70
      %p81 = scmp.eq.s32.totalorder %s21, 0
      %p82 = por %p80, %p81
      %p83 = scmp.ne.s32.totalorder %s69, %s70
      %p84 = scmp.eq.s32.totalorder %s22, 1
      %p85 = por %p83, %p84
      %p87 = scmp.ne.s32.totalorder %s70, %s86
      %p88 = scmp.eq.s32.totalorder %s22, 0
      %p89 = por %p87, %p88
      %s90 = ssub.s32 %s23, %s35
      %p91 = scmp.eq.s32.totalorder %s90, 0
      %s93 = sadd.s32 %s92, 1
      %s94 = scalar_select %p91, %s92, %s93
      %p97 = pneg %p91
      %p98 = scmp.eq.s32.totalorder %s16, 1
      %p99 = por %p97, %p98
      %p100 = scmp.ne.s32.totalorder %s92, %s95
      %p101 = scmp.eq.s32.totalorder %s16, 0
      %p102 = por %p100, %p101
      %p103 = scmp.ne.s32.totalorder %s92, %s95
      %p104 = scmp.eq.s32.totalorder %s21, 1
      %p105 = por %p103, %p104
      %p106 = scmp.ne.s32.totalorder %s95, %s96
      %p107 = scmp.eq.s32.totalorder %s21, 0
      %p108 = por %p106, %p107
      %p109 = scmp.ne.s32.totalorder %s95, %s96
      %p110 = scmp.eq.s32.totalorder %s22, 1
      %p111 = por %p109, %p110
      %p113 = scmp.ne.s32.totalorder %s96, %s112
      %p114 = scmp.eq.s32.totalorder %s22, 0
      %p115 = por %p113, %p114
      %s117 = sadd.s32 %s116, 1
      %p120 = scmp.eq.s32.totalorder %s16, 1
      %p121 = scmp.ne.s32.totalorder %s116, %s118
      %p122 = scmp.eq.s32.totalorder %s16, 0
      %p123 = por %p121, %p122
      %p124 = scmp.ne.s32.totalorder %s116, %s118
      %p125 = scmp.eq.s32.totalorder %s21, 1
      %p126 = por %p124, %p125
      %p127 = scmp.ne.s32.totalorder %s118, %s119
      %p128 = scmp.eq.s32.totalorder %s21, 0
      %p129 = por %p127, %p128
      %p130 = scmp.ne.s32.totalorder %s118, %s119
      %p131 = scmp.eq.s32.totalorder %s22, 1
      %p132 = por %p130, %p131
      %p134 = scmp.ne.s32.totalorder %s119, %s133
      %p135 = scmp.eq.s32.totalorder %s22, 0
      %p136 = por %p134, %p135
      %s138 = sadd.s32 %s137, 1
      %p141 = scmp.eq.s32.totalorder %s16, 1
      %p142 = scmp.ne.s32.totalorder %s137, %s139
      %p143 = scmp.eq.s32.totalorder %s16, 0
      %p144 = por %p142, %p143
      %p145 = scmp.ne.s32.totalorder %s137, %s139
      %p146 = scmp.eq.s32.totalorder %s21, 1
      %p147 = por %p145, %p146
      %p148 = scmp.ne.s32.totalorder %s139, %s140
      %p149 = scmp.eq.s32.totalorder %s21, 0
      %p150 = por %p148, %p149
      %p151 = scmp.ne.s32.totalorder %s139, %s140
      %p152 = scmp.eq.s32.totalorder %s22, 1
      %p153 = por %p151, %p152
      %p155 = scmp.ne.s32.totalorder %s140, %s154
      %p156 = scmp.eq.s32.totalorder %s22, 0
      %p157 = por %p155, %p156
      %s159 = sadd.s32 %s158, 1
      %p162 = scmp.eq.s32.totalorder %s16, 1
      %p163 = scmp.ne.s32.totalorder %s158, %s160
      %p164 = scmp.eq.s32.totalorder %s16, 0
      %p165 = por %p163, %p164
      %p166 = scmp.ne.s32.totalorder %s158, %s160
      %p167 = scmp.eq.s32.totalorder %s21, 1
      %p168 = por %p166, %p167
      %p169 = scmp.ne.s32.totalorder %s160, %s161
      %p170 = scmp.eq.s32.totalorder %s21, 0
      %p171 = por %p169, %p170
      %p172 = scmp.ne.s32.totalorder %s160, %s161
      %p173 = scmp.eq.s32.totalorder %s22, 1
      %p174 = por %p172, %p173
      %p176 = scmp.ne.s32.totalorder %s161, %s175
      %p177 = scmp.eq.s32.totalorder %s22, 0
      %p178 = por %p176, %p177
      %s180 = sadd.s32 %s179, 1
      %p183 = scmp.eq.s32.totalorder %s16, 1
      %p184 = scmp.ne.s32.totalorder %s179, %s181
      %p185 = scmp.eq.s32.totalorder %s16, 0
      %p186 = por %p184, %p185
      %p187 = scmp.ne.s32.totalorder %s179, %s181
      %p188 = scmp.eq.s32.totalorder %s21, 1
      %p189 = por %p187, %p188
      %p190 = scmp.ne.s32.totalorder %s181, %s182
      %p191 = scmp.eq.s32.totalorder %s21, 0
      %p192 = por %p190, %p191
      %p193 = scmp.ne.s32.totalorder %s181, %s182
      %p194 = scmp.eq.s32.totalorder %s22, 1
      %p195 = por %p193, %p194
      %p197 = scmp.ne.s32.totalorder %s182, %s196
      %p198 = scmp.eq.s32.totalorder %s22, 0
      %p199 = por %p197, %p198
      %s200 = ssub.s32 %s23, %s35
      %s201 = ssub.s32 %s24, %s31
      %s202 = sor.u32 %s200, %s201
      %p203 = scmp.eq.s32.totalorder %s202, 0
      %s205 = sadd.s32 %s204, 1
      %s206 = scalar_select %p203, %s204, %s205
      %p209 = pneg %p203
      %p210 = scmp.eq.s32.totalorder %s16, 1
      %p211 = por %p209, %p210
      %p212 = scmp.ne.s32.totalorder %s204, %s207
      %p213 = scmp.eq.s32.totalorder %s16, 0
      %p214 = por %p212, %p213
      %p215 = scmp.ne.s32.totalorder %s204, %s207
      %p216 = scmp.eq.s32.totalorder %s21, 1
      %p217 = por %p215, %p216
      %p218 = scmp.ne.s32.totalorder %s207, %s208
      %p219 = scmp.eq.s32.totalorder %s21, 0
      %p220 = por %p218, %p219
      %p221 = scmp.ne.s32.totalorder %s207, %s208
      %p222 = scmp.eq.s32.totalorder %s22, 1
      %p223 = por %p221, %p222
      %p225 = scmp.ne.s32.totalorder %s208, %s224
      %p226 = scmp.eq.s32.totalorder %s22, 0
      %p227 = por %p225, %p226
      %p228 = scmp.le.s32.totalorder 1, %s16
      %p229 = scmp.lt.s32.totalorder %s16, 3
      %p230 = pnand %p228, %p229
      %p231 = pneg %p230
      // Predicated region
      $region9: #{stylization_block.3} parent=5 // pred_check
        _
      $region10: #{stylization_block.3} parent=5 // pred_check_branch
        %233 = sbr.rel (%p230) target = $region12
      $region11: #{stylization_block.3} parent=5 // pred_region
        %s234 = ssub.s32 %s16, 1
        // Predicated region
        $region13: #{stylization_block.3} parent=11 // pred_check
          %p235 = pneg %p129
        $region14: #{stylization_block.3} parent=11 // pred_check_branch
          %237 = sbr.rel (%p235) target = $region16
        $region15: #{stylization_block.3} parent=11 // pred_region
          _
        $region16: #{stylization_block.3} parent=11 // pred_fallthru
          _
        // Predicated region
        $region17: #{stylization_block.3} parent=11 // pred_check
          %p238 = pneg %p150
        $region18: #{stylization_block.3} parent=11 // pred_check_branch
          %240 = sbr.rel (%p238) target = $region20
        $region19: #{stylization_block.3} parent=11 // pred_region
          _
        $region20: #{stylization_block.3} parent=11 // pred_fallthru
          _
        // Predicated region
        $region21: #{stylization_block.3} parent=11 // pred_check
          %p241 = pneg %p171
        $region22: #{stylization_block.3} parent=11 // pred_check_branch
          %243 = sbr.rel (%p241) target = $region24
        $region23: #{stylization_block.3} parent=11 // pred_region
          _
        $region24: #{stylization_block.3} parent=11 // pred_fallthru
          _
        // Predicated region
        $region25: #{stylization_block.3} parent=11 // pred_check
          %p244 = pneg %p192
        $region26: #{stylization_block.3} parent=11 // pred_check_branch
          %246 = sbr.rel (%p244) target = $region28
        $region27: #{stylization_block.3} parent=11 // pred_region
          _
        $region28: #{stylization_block.3} parent=11 // pred_fallthru
          _
      $region12: #{stylization_block.3} parent=5 // pred_fallthru
        _
      %p247 = scmp.lt.s32.totalorder %s16, 2
      // Predicated region
      $region29: #{stylization_block.3} parent=5 // pred_check
        %p248 = pneg %p247
      $region30: #{stylization_block.3} parent=5 // pred_check_branch
        %250 = sbr.rel (%p248) target = $region32
      $region31: #{stylization_block.3} parent=5 // pred_region
        // Predicated region
        $region33: #{stylization_block.3} parent=31 // pred_check
          %p251 = pneg %p50
        $region34: #{stylization_block.3} parent=31 // pred_check_branch
          %253 = sbr.rel (%p251) target = $region36
        $region35: #{stylization_block.3} parent=31 // pred_region
          %p254 = scmp.lt.s32.totalorder %s23, 1
          %s255 = scalar_select %p254, %s23, 1
          %p256 = scmp.lt.s32.totalorder %s24, 0
          %s257 = scalar_select %p256, %s24, 0
          %s258 = sadd.s32 %s257, %s255
          %s259 = smul.addr %s258, 8
          %s260 = scalar_lea.vmem %s0, %s259
        $region36: #{stylization_block.3} parent=31 // pred_fallthru
          _
        // Predicated region
        $region37: #{stylization_block.3} parent=31 // pred_check
          %p261 = pneg %p76
        $region38: #{stylization_block.3} parent=31 // pred_check_branch
          %263 = sbr.rel (%p261) target = $region40
        $region39: #{stylization_block.3} parent=31 // pred_region
          %p264 = scmp.lt.s32.totalorder %s23, 1
          %s265 = scalar_select %p264, %s23, 1
          %s266 = scalar_lea.vmem %s1, %s265
        $region40: #{stylization_block.3} parent=31 // pred_fallthru
          _
        // Predicated region
        $region41: #{stylization_block.3} parent=31 // pred_check
          %p267 = pneg %p102
        $region42: #{stylization_block.3} parent=31 // pred_check_branch
          %269 = sbr.rel (%p267) target = $region44
        $region43: #{stylization_block.3} parent=31 // pred_region
          %p270 = scmp.lt.s32.totalorder %s23, 1
          %s271 = scalar_select %p270, %s23, 1
          %s272 = scalar_lea.vmem %s2, %s271
        $region44: #{stylization_block.3} parent=31 // pred_fallthru
          _
      $region32: #{stylization_block.3} parent=5 // pred_fallthru
        _
      %p273 = scmp.le.s32.totalorder 1, %s16
      %p274 = scmp.lt.s32.totalorder %s16, 3
      %p275 = pnand %p273, %p274
      %p276 = pneg %p275
      // Predicated region
      $region45: #{stylization_block.3} parent=5 // pred_check
        _
      $region46: #{stylization_block.3} parent=5 // pred_check_branch
        %278 = sbr.rel (%p275) target = $region48
      $region47: #{stylization_block.3} parent=5 // pred_region
        %s279 = ssub.s32 %s16, 1
        %p280 = scmp.lt.s32.totalorder %s25, 1
        %s281 = scalar_select %p280, %s25, 1
        %p282 = scmp.lt.s32.totalorder %s26, 0
        %s283 = scalar_select %p282, %s26, 0
        %s284 = sadd.s32 %s283, %s281
        %s285 = smul.addr %s284, 8
        %s286 = scalar_lea.vmem %s0, %s285
        %p287 = pneg %p56
        %p288 = pneg %p53
        %p289 = scmp.lt.s32.totalorder %s25, 1
        %s290 = scalar_select %p289, %s25, 1
        %s291 = scalar_lea.vmem %s1, %s290
        %p292 = pneg %p82
        %p293 = pneg %p79
        %p294 = scmp.lt.s32.totalorder %s25, 1
        %s295 = scalar_select %p294, %s25, 1
        %s296 = scalar_lea.vmem %s2, %s295
        %p297 = pneg %p108
        %p298 = pneg %p105
        %p299 = pneg %p129
        %p300 = pneg %p126
        %p301 = pneg %p150
        %p302 = pneg %p147
        %p303 = pneg %p171
        %p304 = pneg %p168
        %p305 = pneg %p192
        %p306 = pneg %p189
        %p307 = pneg %p220
        %p308 = pneg %p217
        %s309 = sand.u32 %s207, 1
        %s310 = scalar_lea.sflag [#allocation3], %s309
        %s311 = sand.u32 %s207, 1
        %s312 = smul.addr %s311, 8
        %s313 = scalar_lea.vmem [#allocation2], %s312
        %p314 = scmp.lt.s32.totalorder %s25, 1
        %s315 = scalar_select %p314, %s25, 1
        %p316 = scmp.lt.s32.totalorder %s26, 0
        %s317 = scalar_select %p316, %s26, 0
        %s318 = sadd.s32 %s317, %s315
        %s319 = smul.addr %s318, 8
        %s320 = scalar_lea.vmem %s0, %s319
        %p321 = scmp.lt.s32.totalorder %s25, 1
        %s322 = scalar_select %p321, %s25, 1
        %s323 = scalar_lea.vmem %s1, %s322
        %p324 = scmp.lt.s32.totalorder %s25, 1
        %s325 = scalar_select %p324, %s25, 1
        %s326 = scalar_lea.vmem %s2, %s325
        %v328 = vld [vmem:[%s320] sm:$0xff]
        %329 = vadd.xlane.f32.xlu0 %v328
        %v330 = vpop.xlane.xlu0 %329
        %v331 = vmul.f32 %v330, 0.03125
        %v332 = vmul.f32 %v328, %v328
        %333 = vadd.xlane.f32.xlu0 %v332
        %v334 = vpop.xlane.xlu0 %333
        %v335 = vmul.f32 %v334, 0.03125
        %v336 = vmul.f32 %v331, %v331
        %v337 = vsub.f32 %v335, %v336
        %v338 = vsub.f32 %v328, %v331
        %v339 = vadd.f32 %v337, 1e-05
        %v340 = vrsqrt.pop %v339
        %v341 = vmul.f32 %v338, %v340
        %v342 = vld [vmem:[%s3] sm:$0x1]
        %v344 = vlaneseq
        %v345 = vshrl.u32 %v344, 7
        %v346 = vsub.s32 0, %v345
        %v347 = vrot.slane %v342, %v346
        %v349 = vmul.f32 %v341, %v347
        %v350 = vld [vmem:[%s4] sm:$0x1]
        %v352 = vlaneseq
        %v353 = vshrl.u32 %v352, 7
        %v354 = vsub.s32 0, %v353
        %v355 = vrot.slane %v350, %v354
        %v357 = vadd.f32 %v349, %v355
        %v358 = vld [vmem:[%s323] sm:$0x1]
        %v359 = vadd.f32 %v358, 1.0
        %v361 = vlaneseq
        %v362 = vshrl.u32 %v361, 7
        %v363 = vsub.s32 0, %v362
        %v364 = vrot.slane %v359, %v363
        %v366 = vmul.f32 %v357, %v364
        %v367 = vld [vmem:[%s326] sm:$0x1]
        %v369 = vlaneseq
        %v370 = vshrl.u32 %v369, 7
        %v371 = vsub.s32 0, %v370
        %v372 = vrot.slane %v367, %v371
        %v374 = vadd.f32 %v366, %v372
        %v375 = vxor.u32 %v374, 2147483648
        %v376 = vmul.f32 %v375, 1.442695
        %v377 = vpow.pop %v376
        %v378 = vadd.f32 %v377, 1.0
        %v379 = vrcp.pop %v378
        %v380 = vmul.f32 1.0, %v379
        %v381 = vmul.f32 %v374, %v380
        %v382 = vpack.c.bf16 %v381, %v381
        %v383 = vld [vmem:[%s5] sm:$0xf]
        %v384 = vld [vmem:[%s5 + $0x4] sm:$0xf]
        %v385 = vld [vmem:[%s5 + $0x8] sm:$0xf]
        %v386 = vld [vmem:[%s5 + $0xc] sm:$0xf]
        %v387 = vld [vmem:[%s5 + $0x10] sm:$0xf]
        %v388 = vld [vmem:[%s5 + $0x14] sm:$0xf]
        %v389 = vld [vmem:[%s5 + $0x18] sm:$0xf]
        %v390 = vld [vmem:[%s5 + $0x1c] sm:$0xf]
        %v391 = vld [vmem:[%s5 + $0x20] sm:$0xf]
        %v392 = vld [vmem:[%s5 + $0x24] sm:$0xf]
        %v393 = vld [vmem:[%s5 + $0x28] sm:$0xf]
        %v394 = vld [vmem:[%s5 + $0x2c] sm:$0xf]
        %v395 = vld [vmem:[%s5 + $0x30] sm:$0xf]
        %v396 = vld [vmem:[%s5 + $0x34] sm:$0xf]
        %v397 = vld [vmem:[%s5 + $0x38] sm:$0xf]
        %v398 = vld [vmem:[%s5 + $0x3c] sm:$0xf]
        %v399 = vld [vmem:[%s6] sm:$0x1]
        %v401 = vlaneseq
        %v402 = vshrl.u32 %v401, 7
        %v403 = vsub.s32 0, %v402
        %v404 = vrot.slane %v399, %v403
        %v422 = vunpack.c.l.b16 %v383
        %v423 = vunpack.c.l.b16 %v384
        %v424 = vunpack.c.l.b16 %v385
        %v425 = vunpack.c.l.b16 %v386
        %v426 = vunpack.c.l.b16 %v387
        %v427 = vunpack.c.l.b16 %v388
        %v428 = vunpack.c.l.b16 %v389
        %v429 = vunpack.c.l.b16 %v390
        %v430 = vunpack.c.l.b16 %v391
        %v431 = vunpack.c.l.b16 %v392
        %v432 = vunpack.c.l.b16 %v393
        %v433 = vunpack.c.l.b16 %v394
        %v434 = vunpack.c.l.b16 %v395
        %v435 = vunpack.c.l.b16 %v396
        %v436 = vunpack.c.l.b16 %v397
        %v437 = vunpack.c.l.b16 %v398
        %v438 = vpack.c.b16 %v423, %v422
        %v439 = vpack.c.b16 %v425, %v424
        %v440 = vpack.c.b16 %v427, %v426
        %v441 = vpack.c.b16 %v429, %v428
        %v442 = vpack.c.b16 %v431, %v430
        %v443 = vpack.c.b16 %v433, %v432
        %v444 = vpack.c.b16 %v435, %v434
        %v445 = vpack.c.b16 %v437, %v436
        %454 = vmatprep.subr.bf16.mxu0 0
        %455 = vmatpush1.bf16.msra.mxu0 %v438
        %456 = vmatprep.subr.bf16.mxu0 0
        %457 = vmatpush1.bf16.msra.mxu0 %v439
        %458 = vmatprep.subr.bf16.mxu0 0
        %459 = vmatpush1.bf16.msra.mxu0 %v440
        %460 = vmatprep.subr.bf16.mxu0 0
        %461 = vmatpush1.bf16.msra.mxu0 %v441
        %462 = vmatprep.subr.bf16.mxu0 0
        %463 = vmatpush1.bf16.msra.mxu0 %v442
        %464 = vmatprep.subr.bf16.mxu0 0
        %465 = vmatpush1.bf16.msra.mxu0 %v443
        %466 = vmatprep.subr.bf16.mxu0 0
        %467 = vmatpush1.bf16.msra.mxu0 %v444
        %468 = vmatprep.subr.bf16.mxu0 0
        %469 = vmatpush1.bf16.msra.mxu0 %v445
        %470 = vmatprep.subr.bf16.mxu0 0
        %471 = vmatpush1.bf16.msra.mxu0 0
        %472 = vmatprep.subr.bf16.mxu0 0
        %473 = vmatpush1.bf16.msra.mxu0 0
        %474 = vmatprep.subr.bf16.mxu0 0
        %475 = vmatpush1.bf16.msra.mxu0 0
        %476 = vmatprep.subr.bf16.mxu0 0
        %477 = vmatpush1.bf16.msra.mxu0 0
        %478 = vmatprep.subr.bf16.mxu0 0
        %479 = vmatpush1.bf16.msra.mxu0 0
        %480 = vmatprep.subr.bf16.mxu0 0
        %481 = vmatpush1.bf16.msra.mxu0 0
        %482 = vmatprep.subr.bf16.mxu0 0
        %483 = vmatpush1.bf16.msra.mxu0 0
        %484 = vmatprep.subr.bf16.mxu0 0
        %485 = vmatpush1.bf16.msra.mxu0 0
        %486 = vmatprep.mubr.bf16.mxu0 0
        %487 = vmatmul.mubr.bf16.gmra.mrb[0].mxu0 %v382
        %v488 = vpop.f32.mrb[0].mxu0
        %v489 = vadd.f32 %v404, %v488
        %v490 = vpop.f32.mrb[0].mxu0
        %v491 = vpop.f32.mrb[0].mxu0
        %v492 = vpop.f32.mrb[0].mxu0
        %493 = vdwg.mxu0
        %494 = vst [vmem:[%s313] sm:$0xff] %v489
        %s495 = sand.u32 %s207, 1
        %s496 = scalar_lea.sflag [#allocation3], %s495
        %s497 = sand.u32 %s207, 1
        %s498 = smul.addr %s497, 8
        %s499 = scalar_lea.vmem [#allocation2], %s498
        // Predicated region
        $region49: #{stylization_block.3} parent=47 // pred_check
          %p500 = pneg %p217
        $region50: #{stylization_block.3} parent=47 // pred_check_branch
          %502 = sbr.rel (%p500) target = $region52
        $region51: #{stylization_block.3} parent=47 // pred_region
          %s504 = ssub.s32 128, 128
          %505 = vsyncadd %s496, %s504
          %s506 = sadd.s32 %s26, %s25
          %s507 = smul.addr %s506, 128
          %s508 = scalar_lea.hbm %s7, %s507
          %s510 = sshll.u32 %s499, 4
          %s511 = int_to_ptr.vmem [resolvable:$true] %s510
          %513 = dma.vmem_to_hbm [thread:$0]  %s511, 128, %s508, %s496
        $region52: #{stylization_block.3} parent=47 // pred_fallthru
          _
      $region48: #{stylization_block.3} parent=5 // pred_fallthru
        _
      %p514 = scmp.le.s32.totalorder 2, %s16
      // Predicated region
      $region53: #{stylization_block.3} parent=5 // pred_check
        %p515 = pneg %p514
      $region54: #{stylization_block.3} parent=5 // pred_check_branch
        %517 = sbr.rel (%p515) target = $region56
      $region55: #{stylization_block.3} parent=5 // pred_region
        %s518 = ssub.s32 %s16, 2
        // Predicated region
        $region57: #{stylization_block.3} parent=55 // pred_check
          %p519 = pneg %p223
        $region58: #{stylization_block.3} parent=55 // pred_check_branch
          %521 = sbr.rel (%p519) target = $region60
        $region59: #{stylization_block.3} parent=55 // pred_region
          %s522 = sand.u32 %s208, 1
          %s523 = scalar_lea.sflag [#allocation3], %s522
          %s524 = sand.u32 %s208, 1
          %s525 = smul.addr %s524, 8
          %s526 = scalar_lea.vmem [#allocation2], %s525
          %527 = dma.done %s523, 128
        $region60: #{stylization_block.3} parent=55 // pred_fallthru
          _
      $region56: #{stylization_block.3} parent=5 // pred_fallthru
        _
    $region6: #{stylization_block.3} parent=1 // loop_footer
      %s20 = sadd.s32 1, %s16
    $region7: #{stylization_block.3} parent=1 // loop_footer_branch
      %15 = sbr.rel target = $region3
    $region8: #{stylization_block.3} parent=1 // loop_exit
      _
    %528 = vsyncpa [#allocation3], 1
    %s529 = scalar_lea.sflag [#allocation3], 1
    %530 = vsyncpa %s529, 1

</llo_original>
